<compile_context>
chip_gen: v6e
topology: v6e:2x2x1
jax: 0.10.0
libtpu: 0.0.40
codegen_flags: <defaults>
</compile_context>

<pallas_src>
import math

import jax
import jax.numpy as jnp
from jax.experimental import pallas as pl
from jax.experimental.pallas import tpu as pltpu


# ----------------------------------------------------------------------------
# Kernels
# ----------------------------------------------------------------------------
def _generator_kernel(x_ref, w_ref, b_ref, o_ref):
    """Single-vocab-block path: weight resident, one row tile per grid step.

    x_ref: (tm, d_pad) compute dtype   w_ref: (d_pad, v_pad) compute dtype
    b_ref: (1, v_pad) f32              o_ref: (tm, v_pad) out dtype
    """
    logits = jnp.dot(x_ref[...], w_ref[...], preferred_element_type=jnp.float32)
    logits = logits + b_ref[...].astype(jnp.float32)          # broadcast (1, V)

    # Numerically-stable log_softmax along the vocab (lane) axis, all in f32.
    m = jnp.max(logits, axis=-1, keepdims=True)
    shifted = logits - m
    lse = jnp.log(jnp.sum(jnp.exp(shifted), axis=-1, keepdims=True))
    o_ref[...] = (shifted - lse).astype(o_ref.dtype)


def _generator_kernel_vtiled(x_ref, w_ref, b_ref, o_ref, acc_ref, m_ref, l_ref):
    """Vocab-tiled path: weight streamed in (d_pad, tn) tiles on the inner
    ("arbitrary") grid axis; online max/sum kept in VMEM scratch; raw f32
    logits stashed per tile; full lane-dense output row written on the last
    vocab step.

    x_ref: (tm, d_pad)    w_ref: (d_pad, tn)    b_ref: (1, tn) f32
    o_ref: (tm, v_pad)    acc_ref: (n_vtiles, tm, tn) f32
    m_ref/l_ref: (tm, 1) f32 running max / exp-sum.
    """
    j = pl.program_id(1)
    nt = pl.num_programs(1)
    tn = w_ref.shape[1]

    @pl.when(j == 0)
    def _():
        m_ref[...] = jnp.full(m_ref.shape, -1e37, m_ref.dtype)
        l_ref[...] = jnp.zeros(l_ref.shape, l_ref.dtype)

    logits = jnp.dot(x_ref[...], w_ref[...], preferred_element_type=jnp.float32)
    logits = logits + b_ref[...].astype(jnp.float32)
    acc_ref[j] = logits                                   # stash raw f32 logits

    m_prev = m_ref[...]
    m_new = jnp.maximum(m_prev, jnp.max(logits, axis=-1, keepdims=True))
    l_ref[...] = (l_ref[...] * jnp.exp(m_prev - m_new)
                  + jnp.sum(jnp.exp(logits - m_new), axis=-1, keepdims=True))
    m_ref[...] = m_new

    @pl.when(j == nt - 1)
    def _():
        norm = m_ref[...] + jnp.log(l_ref[...])           # (tm, 1) f32
        # Static (unrolled) loop -> static, lane-aligned output slices.
        for jj in range(acc_ref.shape[0]):
            o_ref[:, jj * tn:(jj + 1) * tn] = (acc_ref[jj] - norm).astype(o_ref.dtype)


# ----------------------------------------------------------------------------
# Tiling / sizing helpers (plain Python, trace-time only)
# ----------------------------------------------------------------------------
def _round_up(a: int, b: int) -> int:
    return (a + b - 1) // b * b


def _pick_row_tile(m_rows: int, *, row_align: int, max_tile: int = 1024,
                   min_grid: int = 8) -> int:
    """Largest aligned row tile <= max_tile; shrink until grid >= min_grid."""
    tm = max(row_align, (max_tile // row_align) * row_align)
    while tm > row_align and -(-m_rows // tm) < min_grid:
        tm = max(row_align, (tm // 2 // row_align) * row_align)
    return tm


def _pick_vocab_tile(v_pad: int, cap: int) -> int:
    """Largest multiple-of-128 divisor of v_pad <= cap, preferring x256 (MXU)."""
    cap = max(128, (min(cap, v_pad) // 128) * 128)
    best = None
    for t in range(cap, 127, -128):
        if v_pad % t == 0:
            if t % 256 == 0:
                return t
            if best is None:
                best = t
    return best if best is not None else 128


def _vmem_limit(need_bytes: int) -> int:
    # >= the v6e/v7x scoped default (32 MiB), with headroom on the estimate.
    return int(min(96 << 20, max(32 << 20, int(need_bytes * 1.3))))


# ----------------------------------------------------------------------------
# One-time parameter prep (hoisted transpose / cast / pad)
# ----------------------------------------------------------------------------
def prepare_generator_params(weight, bias, *, compute_dtype=jnp.bfloat16):
    """weight: (vocab, d_model) torch layout; bias: (vocab,).
    Returns (w_t, b2): w_t (d_pad, v_pad) in compute_dtype, b2 (1, v_pad) f32."""
    vocab, d_model = weight.shape
    d_pad = _round_up(d_model, 128)
    v_pad = _round_up(max(vocab, 128), 128)
    w_t = jnp.asarray(weight).T.astype(compute_dtype)          # (d_model, vocab)
    w_t = jnp.pad(w_t, ((0, d_pad - d_model), (0, v_pad - vocab)))
    b2 = jnp.asarray(bias).astype(jnp.float32).reshape(1, vocab)
    if v_pad > vocab:
        # -1e30 filler: padded columns underflow to 0 in the softmax sum.
        b2 = jnp.pad(b2, ((0, 0), (0, v_pad - vocab)), constant_values=-1e30)
    return w_t, b2


# ----------------------------------------------------------------------------
# Forward wrapper (shape plumbing + pallas_call)
# ----------------------------------------------------------------------------
def generator_forward(x, w_t, b2, *, vocab=None, out_dtype=None,
                      row_tile_cap=1024, min_row_grid=8, vocab_block=512,
                      resident_weight_budget=16 << 20,
                      force_vocab_tiling=False):
    """x: (..., d_model); w_t/b2 from prepare_generator_params."""
    *lead, d_model = x.shape
    d_pad, v_pad = w_t.shape
    vocab = v_pad if vocab is None else int(vocab)
    compute_dtype = w_t.dtype
    out_dtype = x.dtype if out_dtype is None else out_dtype

    m_rows = 1
    for s in lead:
        m_rows *= int(s)
    m_rows = max(m_rows, 1)

    x2 = x.reshape(m_rows, d_model).astype(compute_dtype)
    if d_pad > d_model:                                  # lane-dense x tile
        x2 = jnp.pad(x2, ((0, 0), (0, d_pad - d_model)))

    dsize = jnp.dtype(compute_dtype).itemsize
    osize = jnp.dtype(out_dtype).itemsize
    row_align = 16 if dsize == 2 else 8                  # bf16 packs (16, 128)
    tm = _pick_row_tile(m_rows, row_align=row_align,
                        max_tile=row_tile_cap, min_grid=min_row_grid)
    m_pad = _round_up(m_rows, tm)
    if m_pad > m_rows:                                   # pad rows, slice later
        x2 = jnp.pad(x2, ((0, m_pad - m_rows), (0, 0)))
    grid_m = m_pad // tm

    weight_bytes = d_pad * v_pad * dsize
    use_vtiled = force_vocab_tiling or (2 * weight_bytes > resident_weight_budget)

    if not use_vtiled:
        # Resident weight, single vocab block, 1-D row grid.
        vmem_need = (2 * tm * d_pad * dsize            # x (double-buffered)
                     + 2 * tm * v_pad * osize          # out (double-buffered)
                     + 2 * weight_bytes                # resident weight buffers
                     + 2 * 8 * v_pad * 4               # bias
                     + 3 * tm * v_pad * 4)             # in-kernel f32 temporaries
        out2 = pl.pallas_call(
            _generator_kernel,
            out_shape=jax.ShapeDtypeStruct((m_pad, v_pad), out_dtype),
            grid=(grid_m,),
            in_specs=[
                pl.BlockSpec((tm, d_pad), lambda i: (i, 0)),
                pl.BlockSpec((d_pad, v_pad), lambda i: (0, 0)),   # resident W
                pl.BlockSpec((1, v_pad), lambda i: (0, 0)),       # resident b
            ],
            out_specs=pl.BlockSpec((tm, v_pad), lambda i: (i, 0)),
            compiler_params=pltpu.CompilerParams(
                dimension_semantics=("parallel",),
                vmem_limit_bytes=_vmem_limit(vmem_need)),
            cost_estimate=pl.CostEstimate(
                flops=2 * m_pad * d_pad * v_pad,
                transcendentals=m_pad * v_pad,
                bytes_accessed=(m_pad * d_pad * dsize + weight_bytes
                                + m_pad * v_pad * osize)),
        )(x2, w_t, b2)
    else:
        # Weight streamed over an inner "arbitrary" vocab axis.
        tn = _pick_vocab_tile(v_pad, vocab_block)
        n_vtiles = v_pad // tn
        vmem_need = (2 * tm * d_pad * dsize            # x (resident across j)
                     + 2 * d_pad * tn * dsize          # streamed weight tiles
                     + 2 * 8 * tn * 4                  # streamed bias tiles
                     + 2 * tm * v_pad * osize          # resident output block
                     + tm * v_pad * 4                  # f32 logits stash
                     + 2 * tm * 4                      # m / l scratch
                     + 3 * tm * tn * 4)                # per-step f32 temporaries
        out2 = pl.pallas_call(
            _generator_kernel_vtiled,
            out_shape=jax.ShapeDtypeStruct((m_pad, v_pad), out_dtype),
            grid=(grid_m, n_vtiles),
            in_specs=[
                pl.BlockSpec((tm, d_pad), lambda i, j: (i, 0)),
                pl.BlockSpec((d_pad, tn), lambda i, j: (0, j)),
                pl.BlockSpec((1, tn), lambda i, j: (0, j)),
            ],
            out_specs=pl.BlockSpec((tm, v_pad), lambda i, j: (i, 0)),
            scratch_shapes=[
                pltpu.VMEM((n_vtiles, tm, tn), jnp.float32),  # logits stash
                pltpu.VMEM((tm, 1), jnp.float32),             # running max
                pltpu.VMEM((tm, 1), jnp.float32),             # running exp-sum
            ],
            compiler_params=pltpu.CompilerParams(
                dimension_semantics=("parallel", "arbitrary"),
                vmem_limit_bytes=_vmem_limit(vmem_need)),
            cost_estimate=pl.CostEstimate(
                flops=2 * m_pad * d_pad * v_pad,
                transcendentals=2 * m_pad * v_pad,
                bytes_accessed=(m_pad * d_pad * dsize + grid_m * weight_bytes
                                + m_pad * v_pad * osize)),
        )(x2, w_t, b2)

    out2 = out2[:m_rows, :vocab]
    return out2.reshape(*lead, vocab)


# ----------------------------------------------------------------------------
# Demo / correctness check
# ----------------------------------------------------------------------------
if __name__ == "__main__":
    B, S, D_MODEL, VOCAB = 2, 8, 32, 128   # small; vocab lane-dense (128)

    key = jax.random.PRNGKey(0)
    kx, kw, kb = jax.random.split(key, 3)

    x = jax.random.normal(kx, (B, S, D_MODEL), dtype=jnp.float32)
    # nn.Linear-style init (uniform +/- 1/sqrt(fan_in)); torch layout (vocab, d_model).
    bound = 1.0 / math.sqrt(D_MODEL)
    weight = jax.random.uniform(kw, (VOCAB, D_MODEL), jnp.float32, -bound, bound)
    bias = jax.random.uniform(kb, (VOCAB,), jnp.float32, -bound, bound)

    # One-time parameter prep (hoisted transpose / cast / pad).
    w_t, b2 = prepare_generator_params(weight, bias, compute_dtype=jnp.bfloat16)

    fwd = jax.jit(lambda xx, ww, bb: generator_forward(xx, ww, bb, vocab=VOCAB))
    out = jax.block_until_ready(fwd(x, w_t, b2))

    # References: full-f32 and bf16-operand (matches the kernel's MXU precision).
    ref_f32 = jax.nn.log_softmax(
        jnp.einsum("bsd,vd->bsv", x, weight) + bias[None, None, :], axis=-1)
    xb = x.astype(jnp.bfloat16).astype(jnp.float32)
    wb = weight.astype(jnp.bfloat16).astype(jnp.float32)
    ref_bf16 = jax.nn.log_softmax(
        jnp.einsum("bsd,vd->bsv", xb, wb) + bias[None, None, :], axis=-1)

    assert out.shape == (B, S, VOCAB) and out.dtype == x.dtype
    assert jnp.allclose(out, ref_bf16, atol=2e-3, rtol=2e-3), "mismatch vs bf16 ref"
    assert jnp.allclose(out, ref_f32, atol=3e-2, rtol=3e-2), "mismatch vs f32 ref"
    assert jnp.allclose(jnp.sum(jnp.exp(out), axis=-1), 1.0, atol=1e-3)

    # Exercise the large-vocab (vocab-tiled, online-logsumexp) path at small
    # scale: vocab = 384 streamed as three 128-wide weight tiles.
    VOCAB2 = 384
    kw2, kb2 = jax.random.split(jax.random.PRNGKey(1))
    weight2 = jax.random.uniform(kw2, (VOCAB2, D_MODEL), jnp.float32, -bound, bound)
    bias2 = jax.random.uniform(kb2, (VOCAB2,), jnp.float32, -bound, bound)
    w2_t, b2_2 = prepare_generator_params(weight2, bias2, compute_dtype=jnp.bfloat16)

    fwd_vt = jax.jit(lambda xx, ww, bb: generator_forward(
        xx, ww, bb, vocab=VOCAB2, force_vocab_tiling=True, vocab_block=128))
    out_vt = jax.block_until_ready(fwd_vt(x, w2_t, b2_2))

    wb2 = weight2.astype(jnp.bfloat16).astype(jnp.float32)
    ref2 = jax.nn.log_softmax(
        jnp.einsum("bsd,vd->bsv", xb, wb2) + bias2[None, None, :], axis=-1)
    assert out_vt.shape == (B, S, VOCAB2)
    assert jnp.allclose(out_vt, ref2, atol=2e-3, rtol=2e-3), "vocab-tiled mismatch"
    assert jnp.allclose(jnp.sum(jnp.exp(out_vt), axis=-1), 1.0, atol=1e-3)

    print("KERNEL_OK")
</pallas_src>

<mosaic_0001>
module attributes {stable_mosaic.version = 11 : i64} {
  func.func @_generator_kernel(%arg0: i32, %arg1: memref<16x128xbf16, #tpu.memory_space<vmem>>, %arg2: memref<128x128xbf16, #tpu.memory_space<vmem>>, %arg3: memref<1x128xf32, #tpu.memory_space<vmem>>, %arg4: memref<16x128xf32, #tpu.memory_space<vmem>>) attributes {dimension_semantics = [#tpu.dimension_semantics<parallel>], iteration_bounds = array<i64: 1>, scalar_prefetch = 0 : i64, scratch_operands = 0 : i64, tpu.core_type = #tpu.core_type<tc>, window_params = [{transform_indices = @transform_0, window_bounds = array<i64: 16, 128>}, {pipeline_mode = #tpu.pipeline_mode<synchronous>, transform_indices = @transform_1, window_bounds = array<i64: 128, 128>}, {pipeline_mode = #tpu.pipeline_mode<synchronous>, transform_indices = @transform_2, window_bounds = array<i64: 1, 128>}, {transform_indices = @transform_3, window_bounds = array<i64: 16, 128>}]} {
    %c0 = arith.constant 0 : index
    %c0_0 = arith.constant 0 : index
    %0 = vector.load %arg1[%c0, %c0_0] : memref<16x128xbf16, #tpu.memory_space<vmem>>, vector<16x128xbf16>
    %c0_1 = arith.constant 0 : index
    %c0_2 = arith.constant 0 : index
    %1 = vector.load %arg2[%c0_1, %c0_2] : memref<128x128xbf16, #tpu.memory_space<vmem>>, vector<128x128xbf16>
    %cst = arith.constant dense<0.000000e+00> : vector<16x128xf32>
    %2 = tpu.matmul %0, %1, %cst {dimension_numbers = #tpu.dot_dimension_numbers<[1], [0], [0], [1], [0, 0, 1, 1], [], []>} : vector<16x128xbf16>, vector<128x128xbf16>, vector<16x128xf32> -> vector<16x128xf32>
    %c0_3 = arith.constant 0 : index
    %c0_4 = arith.constant 0 : index
    %3 = vector.load %arg3[%c0_3, %c0_4] : memref<1x128xf32, #tpu.memory_space<vmem>>, vector<1x128xf32>
    %4 = vector.broadcast %3 : vector<1x128xf32> to vector<16x128xf32>
    %5 = arith.addf %2, %4 : vector<16x128xf32>
    %cst_5 = arith.constant dense<0xFF800000> : vector<16xf32>
    %6 = vector.multi_reduction <maximumf>, %5, %cst_5 [1] : vector<16x128xf32> to vector<16xf32>
    %7 = vector.shape_cast %6 : vector<16xf32> to vector<16x1xf32>
    %8 = vector.broadcast %7 : vector<16x1xf32> to vector<16x128xf32>
    %9 = arith.subf %5, %8 : vector<16x128xf32>
    %10 = math.exp %9 : vector<16x128xf32>
    %cst_6 = arith.constant dense<0.000000e+00> : vector<16xf32>
    %11 = vector.multi_reduction <add>, %10, %cst_6 [1] : vector<16x128xf32> to vector<16xf32>
    %12 = vector.shape_cast %11 : vector<16xf32> to vector<16x1xf32>
    %13 = math.log %12 : vector<16x1xf32>
    %14 = vector.broadcast %13 : vector<16x1xf32> to vector<16x128xf32>
    %15 = arith.subf %9, %14 : vector<16x128xf32>
    %c0_7 = arith.constant 0 : index
    %c0_8 = arith.constant 0 : index
    %16 = vector.load %arg4[%c0_7, %c0_8] : memref<16x128xf32, #tpu.memory_space<vmem>>, vector<16x128xf32>
    tpu.vector_store %arg4[%c0_7, %c0_8], %15 {strides = array<i32>} : memref<16x128xf32, #tpu.memory_space<vmem>>, vector<16x128xf32>,
    return
  }
  func.func @transform_0(%arg0: i32) -> (i32, i32) {
    %c0_i32 = arith.constant 0 : i32
    %c0_i32_0 = arith.constant 0 : i32
    return %arg0, %c0_i32 : i32, i32
  }
  func.func @transform_1(%arg0: i32) -> (i32, i32) {
    %c0_i32 = arith.constant 0 : i32
    %c0_i32_0 = arith.constant 0 : i32
    %c0_i32_1 = arith.constant 0 : i32
    return %c0_i32, %c0_i32_0 : i32, i32
  }
  func.func @transform_2(%arg0: i32) -> (i32, i32) {
    %c0_i32 = arith.constant 0 : i32
    %c0_i32_0 = arith.constant 0 : i32
    %c0_i32_1 = arith.constant 0 : i32
    return %c0_i32, %c0_i32_0 : i32, i32
  }
  func.func @transform_3(%arg0: i32) -> (i32, i32) {
    %c0_i32 = arith.constant 0 : i32
    %c0_i32_0 = arith.constant 0 : i32
    return %arg0, %c0_i32 : i32, i32
  }
}

</mosaic_0001>

<llo_original>
// kernel: _lambda_.1
$region0: #{_lambda_.1}
  #allocation0 [shape = 'u32[]', space=smem, size = 0x4, offset = 0x4, fixed_abs, tag = 'smem constant byte address 0x4 - core index']
  #allocation1 [shape = 'u32[144,128]{1,0:T(1,128)}', space=vmem, size = 0x12000, scoped, tag = 'internal scratch']
  %s0 = inlined_call_operand.vmem [shape: bf16[16,128], index: 0, kind: input, shape index: {}]
  %s1 = inlined_call_operand.hbm [shape: bf16[128,128], index: 1, kind: input, shape index: {}]
  %s2 = inlined_call_operand.vmem [shape: f32[1,128], index: 2, kind: input, shape index: {}]
  %s3 = inlined_call_operand.hbm [shape: f32[16,128], index: 3, kind: output, shape index: {}]
  %s4 = sld [smem:[#allocation0]]
  $region26: #{_lambda_.1} parent=0
    _
  %s6 = ssub.s32 1, %s4
  %s7 = scalar_select 0, %s6, %s4
  $region1: #{_lambda_.1} parent=0
    #allocation2 [shape = 'u8[32768]{0}', space=vmem, size = 0x8000, scoped, tag = 'input window, operand 1, single buffered']
    #allocation3 [shape = 's32[1]{0}', space=sflag, size = 0x4, scoped, tag = 'scoped memory for _lambda_.1']
    #allocation4 [shape = 's32[1]{0}', space=sflag, size = 0x4, scoped, tag = 'scoped memory for _lambda_.1']
    #allocation5 [shape = 'u8[8192]{0}', space=vmem, size = 0x2000, scoped, tag = 'output window, operand 0, single buffered']
    %8 = vsyncpa [#allocation3], 0
    %9 = vsyncpa [#allocation4], 0
    // Predicated region
    $region2: #{_lambda_.1} parent=1 // pred_check
      _
    $region3: #{_lambda_.1} parent=1 // pred_check_branch
      %11 = sbr.rel (0) target = $region5
    $region4: #{_lambda_.1} parent=1 // pred_region
      _
    $region5: #{_lambda_.1} parent=1 // pred_fallthru
      _
    // Predicated region
    $region6: #{_lambda_.1} parent=1 // pred_check
      _
    $region7: #{_lambda_.1} parent=1 // pred_check_branch
      %13 = sbr.rel (0) target = $region9
    $region8: #{_lambda_.1} parent=1 // pred_region
      %s15 = ssub.s32 1024, 1024
      %16 = vsyncadd [#allocation3], %s15
      %s17 = sshll.u32 [#allocation2], 4
      %s18 = int_to_ptr.vmem [resolvable:$true] %s17
      %23 = dma.hbm_to_vmem [thread:$0]  %s1, 1024, %s18, [#allocation3], 64, 64, 4
    $region9: #{_lambda_.1} parent=1 // pred_fallthru
      _
    // Predicated region
    $region10: #{_lambda_.1} parent=1 // pred_check
      _
    $region11: #{_lambda_.1} parent=1 // pred_check_branch
      %25 = sbr.rel (0) target = $region13
    $region12: #{_lambda_.1} parent=1 // pred_region
      _
    $region13: #{_lambda_.1} parent=1 // pred_fallthru
      _
    // Predicated region
    $region14: #{_lambda_.1} parent=1 // pred_check
      _
    $region15: #{_lambda_.1} parent=1 // pred_check_branch
      %27 = sbr.rel (0) target = $region17
    $region16: #{_lambda_.1} parent=1 // pred_region
      %28 = dma.done [#allocation3], 1024
    $region17: #{_lambda_.1} parent=1 // pred_fallthru
      _
    %v30 = vld [vmem:[%s0] sm:$0xf]
    %v31 = vld [vmem:[%s0 + $0x4] sm:$0xf]
    %v32 = vld [vmem:[#allocation2] sm:$0xf]
    %v33 = vld [vmem:[#allocation2 + $0x4] sm:$0xf]
    %v34 = vld [vmem:[#allocation2 + $0x8] sm:$0xf]
    %v35 = vld [vmem:[#allocation2 + $0xc] sm:$0xf]
    %v36 = vld [vmem:[#allocation2 + $0x10] sm:$0xf]
    %v37 = vld [vmem:[#allocation2 + $0x14] sm:$0xf]
    %v38 = vld [vmem:[#allocation2 + $0x18] sm:$0xf]
    %v39 = vld [vmem:[#allocation2 + $0x1c] sm:$0xf]
    %v40 = vld [vmem:[#allocation2 + $0x20] sm:$0xf]
    %v41 = vld [vmem:[#allocation2 + $0x24] sm:$0xf]
    %v42 = vld [vmem:[#allocation2 + $0x28] sm:$0xf]
    %v43 = vld [vmem:[#allocation2 + $0x2c] sm:$0xf]
    %v44 = vld [vmem:[#allocation2 + $0x30] sm:$0xf]
    %v45 = vld [vmem:[#allocation2 + $0x34] sm:$0xf]
    %v46 = vld [vmem:[#allocation2 + $0x38] sm:$0xf]
    %v47 = vld [vmem:[#allocation2 + $0x3c] sm:$0xf]
    %v48 = vld [vmem:[%s2] sm:$0x1]
    %v50 = vlaneseq
    %v51 = vshrl.u32 %v50, 7
    %v52 = vsub.s32 0, %v51
    %v53 = vrot.slane %v48, %v52
    %v57 = vunpack.c.l.b16 %v30
    %v58 = vunpack.c.l.b16 %v31
    %v59 = vpack.c.b16 %v58, %v57
    %v77 = vunpack.c.l.b16 %v32
    %v78 = vunpack.c.l.b16 %v33
    %v79 = vunpack.c.l.b16 %v34
    %v80 = vunpack.c.l.b16 %v35
    %v81 = vunpack.c.l.b16 %v36
    %v82 = vunpack.c.l.b16 %v37
    %v83 = vunpack.c.l.b16 %v38
    %v84 = vunpack.c.l.b16 %v39
    %v85 = vunpack.c.l.b16 %v40
    %v86 = vunpack.c.l.b16 %v41
    %v87 = vunpack.c.l.b16 %v42
    %v88 = vunpack.c.l.b16 %v43
    %v89 = vunpack.c.l.b16 %v44
    %v90 = vunpack.c.l.b16 %v45
    %v91 = vunpack.c.l.b16 %v46
    %v92 = vunpack.c.l.b16 %v47
    %v93 = vpack.c.b16 %v78, %v77
    %v94 = vpack.c.b16 %v80, %v79
    %v95 = vpack.c.b16 %v82, %v81
    %v96 = vpack.c.b16 %v84, %v83
    %v97 = vpack.c.b16 %v86, %v85
    %v98 = vpack.c.b16 %v88, %v87
    %v99 = vpack.c.b16 %v90, %v89
    %v100 = vpack.c.b16 %v92, %v91
    %109 = vmatprep.subr.bf16.mxu0 0
    %110 = vmatpush1.bf16.msra.mxu0 %v100
    %111 = vmatprep.subr.bf16.mxu0 0
    %112 = vmatpush1.bf16.msra.mxu0 %v99
    %113 = vmatprep.subr.bf16.mxu0 0
    %114 = vmatpush1.bf16.msra.mxu0 %v98
    %115 = vmatprep.subr.bf16.mxu0 0
    %116 = vmatpush1.bf16.msra.mxu0 %v97
    %117 = vmatprep.subr.bf16.mxu0 0
    %118 = vmatpush1.bf16.msra.mxu0 %v96
    %119 = vmatprep.subr.bf16.mxu0 0
    %120 = vmatpush1.bf16.msra.mxu0 %v95
    %121 = vmatprep.subr.bf16.mxu0 0
    %122 = vmatpush1.bf16.msra.mxu0 %v94
    %123 = vmatprep.subr.bf16.mxu0 0
    %124 = vmatpush1.bf16.msra.mxu0 %v93
    %125 = vmatprep.subr.bf16.mxu0 0
    %126 = vmatpush2.bf16.msra.mxu0 0
    %127 = vmatprep.subr.bf16.mxu0 0
    %128 = vmatpush2.bf16.msra.mxu0 0
    %129 = vmatprep.subr.bf16.mxu0 0
    %130 = vmatpush2.bf16.msra.mxu0 0
    %131 = vmatprep.subr.bf16.mxu0 0
    %132 = vmatpush2.bf16.msra.mxu0 0
    %133 = vmatprep.subr.bf16.mxu0 0
    %134 = vmatpush2.bf16.msra.mxu0 0
    %135 = vmatprep.subr.bf16.mxu0 0
    %136 = vmatpush2.bf16.msra.mxu0 0
    %137 = vmatprep.subr.bf16.mxu0 0
    %138 = vmatpush2.bf16.msra.mxu0 0
    %139 = vmatprep.subr.bf16.mxu0 0
    %140 = vmatpush2.bf16.msra.mxu0 0
    %141 = vmatprep.mubr.bf16.mxu0 0
    %142 = vmatmul.mubr.bf16.gmra.mxu0 %v59
    %v143 = vpop.f32.mrf.mxu0
    %v144 = vadd.f32 %v53, %v143
    %v145 = vpop.f32.mrf.mxu0
    %v146 = vpop.f32.mrf.mxu0
    %v147 = vadd.f32 %v53, %v146
    %v148 = vpop.f32.mrf.mxu0
    %149 = vdwg.mxu0
    %150 = vmax.xlane.f32.xlu0 %v144
    %v151 = vpop.xlane.xlu0 %150
    %152 = vmax.xlane.f32.xlu0 %v147
    %v153 = vpop.xlane.xlu0 %152
    %v154 = vsub.f32 %v144, %v151
    %v155 = vsub.f32 %v147, %v153
    %v156 = vmul.f32 %v154, 1.442695
    %v157 = vpow.pop %v156
    %v158 = vmul.f32 %v155, 1.442695
    %v159 = vpow.pop %v158
    %160 = vadd.xlane.f32.xlu0 %v157
    %v161 = vpop.xlane.xlu0 %160
    %162 = vadd.xlane.f32.xlu0 %v159
    %v163 = vpop.xlane.xlu0 %162
    %v164 = vlog2.pop %v161
    %v165 = vmul.f32 %v164, 0.6931472
    %v166 = vlog2.pop %v163
    %v167 = vmul.f32 %v166, 0.6931472
    %v168 = vsub.f32 %v154, %v165
    %v169 = vsub.f32 %v155, %v167
    %170 = vst [vmem:[#allocation5] sm:$0xff] %v168
    %171 = vst [vmem:[#allocation5 + $0x8] sm:$0xff] %v169
    // Predicated region
    $region18: #{_lambda_.1} parent=1 // pred_check
      _
    $region19: #{_lambda_.1} parent=1 // pred_check_branch
      %173 = sbr.rel (0) target = $region21
    $region20: #{_lambda_.1} parent=1 // pred_region
      %s175 = ssub.s32 256, 256
      %176 = vsyncadd [#allocation4], %s175
      %s177 = sshll.u32 [#allocation5], 4
      %s178 = int_to_ptr.vmem [resolvable:$true] %s177
      %183 = dma.vmem_to_hbm [thread:$0]  %s178, 256, %s3, [#allocation4], 128, 128, 8
    $region21: #{_lambda_.1} parent=1 // pred_fallthru
      _
    // Predicated region
    $region22: #{_lambda_.1} parent=1 // pred_check
      _
    $region23: #{_lambda_.1} parent=1 // pred_check_branch
      %185 = sbr.rel (0) target = $region25
    $region24: #{_lambda_.1} parent=1 // pred_region
      %186 = dma.done [#allocation4], 256
    $region25: #{_lambda_.1} parent=1 // pred_fallthru
      _
    %187 = vsyncpa [#allocation3], 1
    %188 = vsyncpa [#allocation4], 1

</llo_original>
